<compile_context>
chip_gen: v6e
topology: v6e:2x2x1
jax: 0.10.0
libtpu: 0.0.40
codegen_flags: <defaults>
</compile_context>

<pallas_src>
from functools import partial

import jax
import jax.numpy as jnp
from jax.experimental import pallas as pl
from jax.experimental.pallas import tpu as pltpu

LEAKY_SLOPE = 0.2
# Scoped VMEM cap: leave headroom below v7x's 64 MiB physical per-TC VMEM (review item).
_VMEM_LIMIT = 48 * 1024 * 1024


# ----------------------------- tiling helpers ------------------------------

def _pick_row_tile(H, per_row_bytes, align, budget=4 * 1024 * 1024):
    """Largest row tile dividing H: full H if it fits `budget`, else an `align` multiple.

    The fallback (full extent) is always a legal block shape, so the (8,128) sublane
    constraint can never be silently violated (review correctness concern)."""
    if H * per_row_bytes <= budget:
        return H
    cap = max(1, budget // max(per_row_bytes, 1))
    for th in range(min(cap, H), 0, -1):
        if H % th == 0 and th % align == 0:
            return th
    return H


def _conv_row_tile(H, W, Wp, Cin, max_pix=8192, buf_budget=4 * 1024 * 1024):
    """Row tile for conv2d: bounds TH*W pixels and the bf16 input tile bytes."""
    max_rows = max(1, min(H, max_pix // max(W, 1), buf_budget // max(Wp * Cin * 2, 1)))
    if max_rows >= H:
        return H
    for th in range(max_rows, 0, -1):
        if H % th == 0 and (th * W) % 8 == 0:
            return th
    return H  # full extent -> output block dim becomes the full array dim (always legal)


# ----------------------------- conv2d kernel -------------------------------

def _conv2d_kernel(*refs, TH, W, KH, KW, leaky, transpose_out):
    """Stride-1 'same' conv, auto-pipelined row tiles with halo-row BlockSpecs.

    refs = (body, halo_0..halo_{KH-2}, w, b, out)
      body : (1, TH, Wp, Cin) bf16  -- padded rows [t*TH, t*TH+TH)
      halo : (1, 1, Wp, Cin)  bf16  -- padded rows t*TH+TH+d
      w    : (KH*KW*Cin, Cout) bf16 (resident across the grid)
      b    : (1, Cout) f32
      out  : (1, TH*W, Cout)  or, for small Cout, (1, Cout, TH*W) lane-dense (review item).
    """
    nh = KH - 1
    x_ref = refs[0]
    halo_refs = refs[1:1 + nh]
    w_ref, b_ref, o_ref = refs[1 + nh], refs[2 + nh], refs[3 + nh]
    Cin = x_ref.shape[-1]

    xt = x_ref[0]
    if nh:
        xt = jnp.concatenate([xt] + [h[0] for h in halo_refs], axis=0)   # (TH+KH-1, Wp, Cin)

    # im2col: fold the KH*KW taps into the matmul K dimension -> a single MXU dot.
    # TODO(synk): if a bundle dump shows the lane-axis concat dominating vmatmul for the
    # small-Cin convs, fall back to KH accumulated dots with a KW-only fold (review item).
    taps = [xt[kh:kh + TH, kw:kw + W, :] for kh in range(KH) for kw in range(KW)]
    patch = taps[0] if len(taps) == 1 else jnp.concatenate(taps, axis=-1)
    patch = patch.reshape(TH * W, KH * KW * Cin)                         # bf16
    acc = jnp.dot(patch, w_ref[...], preferred_element_type=jnp.float32)
    acc = acc + b_ref[...]
    if leaky:
        acc = jnp.where(acc >= 0.0, acc, LEAKY_SLOPE * acc)
    if transpose_out:
        o_ref[0] = acc.T.astype(o_ref.dtype)          # (Cout, TH*W): lane-dense store
    else:
        o_ref[0] = acc.astype(o_ref.dtype)


@partial(jax.jit, static_argnames=("leaky", "out_dtype"))
def conv2d(x, w, b, *, leaky=True, out_dtype=jnp.float32):
    # x: (N, H, W, Cin)   w: (KH, KW, Cin, Cout)   b: (1, Cout)
    N, H, W, Cin = x.shape
    KH, KW, _, Cout = w.shape
    ph0, ph1 = (KH - 1) // 2, (KH - 1) - (KH - 1) // 2
    pw0, pw1 = (KW - 1) // 2, (KW - 1) - (KW - 1) // 2
    xb = x.astype(jnp.bfloat16)
    # TODO(synk): fold the 'same' padding into the kernel (clamped halo rows + zeroed W halo
    # columns) to remove this extra HBM pass; even-kernel pad (0,1) convention assumed.
    xp = jnp.pad(xb, ((0, 0), (ph0, ph1), (pw0, pw1), (0, 0))) if (KH > 1 or KW > 1) else xb
    Wp = W + KW - 1
    TH = _conv_row_tile(H, W, Wp, Cin)
    NT = H // TH
    wq = w.astype(jnp.bfloat16).reshape(KH * KW * Cin, Cout)
    bq = b.astype(jnp.float32).reshape(1, Cout)

    # Lane-dense transposed output for small-Cout heads (flow=2, rgb=3, 1x1 half convs).
    transpose_out = (Cout <= 8) and (TH == H or (TH * W) % 128 == 0)

    in_specs = [pl.BlockSpec((1, TH, Wp, Cin), lambda n, t: (n, t, 0, 0))]
    for d in range(KH - 1):  # halo rows of the same padded array (no manual DMA needed)
        in_specs.append(pl.BlockSpec((1, 1, Wp, Cin),
                                     lambda n, t, d=d: (n, t * TH + TH + d, 0, 0)))
    in_specs += [pl.BlockSpec((KH * KW * Cin, Cout), lambda n, t: (0, 0)),
                 pl.BlockSpec((1, Cout), lambda n, t: (0, 0))]
    args = [xp] * KH + [wq, bq]

    if transpose_out:
        out_shape = jax.ShapeDtypeStruct((N, Cout, H * W), out_dtype)
        out_spec = pl.BlockSpec((1, Cout, TH * W), lambda n, t: (n, 0, t))
    else:
        out_shape = jax.ShapeDtypeStruct((N, H * W, Cout), out_dtype)
        out_spec = pl.BlockSpec((1, TH * W, Cout), lambda n, t: (n, t, 0))

    out = pl.pallas_call(
        partial(_conv2d_kernel, TH=TH, W=W, KH=KH, KW=KW, leaky=leaky,
                transpose_out=transpose_out),
        out_shape=out_shape,
        grid=(N, NT),
        in_specs=in_specs,
        out_specs=out_spec,
        compiler_params=pltpu.CompilerParams(
            dimension_semantics=("parallel", "parallel"),   # row-tile axis shardable on v7x
            vmem_limit_bytes=_VMEM_LIMIT),
    )(*args)
    if transpose_out:
        out = jnp.transpose(out, (0, 2, 1))   # cheap: Cout <= 8 channels
    return out.reshape(N, H, W, Cout)


# ----------------------------- avg pool 2x ---------------------------------

def _avgpool2x_kernel(x_ref, o_ref, *, TH2, W2, C):
    # x_ref: (1, 2*TH2, 2*W2*C) lane-dense rows; o_ref: (1, TH2, W2*C).
    x = x_ref[0].astype(jnp.float32)
    xr = x.reshape(TH2, 2, W2, 2 * C)
    top, bot = xr[:, 0], xr[:, 1]                       # (TH2, W2, 2C)
    s = top[..., :C] + top[..., C:] + bot[..., :C] + bot[..., C:]
    o_ref[0] = (0.25 * s).reshape(TH2, W2 * C).astype(o_ref.dtype)


@jax.jit
def avg_pool_2x(x):
    N, H, W, C = x.shape
    H2, W2 = H // 2, W // 2
    # Lane-dense flattened (rows, W*C) layout: free reshapes in the wrapper (review item:
    # C=3 images / small-C features wasted >90% of each vector op with C on lanes).
    xs = x[:, :2 * H2, :2 * W2, :].reshape(N, 2 * H2, 2 * W2 * C)
    TH2 = _pick_row_tile(H2, per_row_bytes=6 * W2 * C * 4, align=8)
    NT = H2 // TH2
    out = pl.pallas_call(
        partial(_avgpool2x_kernel, TH2=TH2, W2=W2, C=C),
        out_shape=jax.ShapeDtypeStruct((N, H2, W2 * C), x.dtype),
        grid=(N, NT),
        in_specs=[pl.BlockSpec((1, 2 * TH2, 2 * W2 * C), lambda n, t: (n, t, 0))],
        out_specs=pl.BlockSpec((1, TH2, W2 * C), lambda n, t: (n, t, 0)),
        compiler_params=pltpu.CompilerParams(
            dimension_semantics=("parallel", "parallel"),
            vmem_limit_bytes=_VMEM_LIMIT),
    )(xs)
    return out.reshape(N, H2, W2, C)


# ----------------------------- 2x upsampling --------------------------------

def _up2x_bilinear_kernel(*refs, TH, W, C, scale, has_residual):
    # refs = (body (1,TH,Wp,C), halo0 (1,1,Wp,C), halo1 (1,1,Wp,C), [residual (1,2TH,2WC)], out)
    body_ref, h0_ref, h1_ref = refs[0], refs[1], refs[2]
    res_ref = refs[3] if has_residual else None
    o_ref = refs[-1]
    X = jnp.concatenate([body_ref[0], h0_ref[0], h1_ref[0]], axis=0).astype(jnp.float32)
    # Horizontal pass: out col 2k = .25*g[k-1]+.75*g[k]; 2k+1 = .75*g[k]+.25*g[k+1]
    A, B, D = X[:, 0:W, :], X[:, 1:1 + W, :], X[:, 2:2 + W, :]
    even_c = 0.25 * A + 0.75 * B
    odd_c = 0.75 * B + 0.25 * D
    Q = jnp.stack([even_c, odd_c], axis=2).reshape(TH + 2, 2 * W * C)
    # Vertical pass: out row 2r = .25*q[r]+.75*q[r+1]; 2r+1 = .75*q[r+1]+.25*q[r+2]
    er = 0.25 * Q[0:TH] + 0.75 * Q[1:TH + 1]
    orr = 0.75 * Q[1:TH + 1] + 0.25 * Q[2:TH + 2]
    out = jnp.stack([er, orr], axis=1).reshape(2 * TH, 2 * W * C) * scale
    if has_residual:
        out = out + res_ref[0].astype(jnp.float32)       # fused `residual + 2*upsample(flow)`
    o_ref[0] = out.astype(o_ref.dtype)


def _up2x_nearest_kernel(x_ref, o_ref, *, TH, W, C, scale):
    x = x_ref[0]                                          # (TH, W, C)
    row = jnp.concatenate([x, x], axis=-1).reshape(TH, 2 * W * C)   # duplicate columns
    out = jnp.stack([row, row], axis=1).reshape(2 * TH, 2 * W * C)  # duplicate rows
    if scale != 1.0:
        out = out * jnp.asarray(scale, out.dtype)
    o_ref[0] = out.astype(o_ref.dtype)


@partial(jax.jit, static_argnames=("mode", "scale"))
def upsample_2x(x, *, mode="bilinear", scale=1.0, residual=None):
    """2x nearest/bilinear upsample; optional fused `residual + scale*upsample(x)`.

    Output is produced in a lane-dense (N, 2H, 2W*C) layout; the reshape back to
    (N, 2H, 2W, C) is a free row-major reshape."""
    N, H, W, C = x.shape
    out_dtype = x.dtype if residual is None else residual.dtype
    if mode == "bilinear":
        xp = jnp.pad(x, ((0, 0), (1, 1), (1, 1), (0, 0)), mode="edge")
        Wp = W + 2
        TH = _pick_row_tile(H, per_row_bytes=(Wp * C * 4 + 20 * W * C * 4), align=4)
        NT = H // TH
        in_specs = [pl.BlockSpec((1, TH, Wp, C), lambda n, t: (n, t, 0, 0)),
                    pl.BlockSpec((1, 1, Wp, C), lambda n, t: (n, t * TH + TH, 0, 0)),
                    pl.BlockSpec((1, 1, Wp, C), lambda n, t: (n, t * TH + TH + 1, 0, 0))]
        args = [xp, xp, xp]
        has_res = residual is not None
        if has_res:
            in_specs.append(pl.BlockSpec((1, 2 * TH, 2 * W * C), lambda n, t: (n, t, 0)))
            args.append(residual.reshape(N, 2 * H, 2 * W * C))
        kern = partial(_up2x_bilinear_kernel, TH=TH, W=W, C=C,
                       scale=float(scale), has_residual=has_res)
    else:
        TH = _pick_row_tile(H, per_row_bytes=10 * W * C * x.dtype.itemsize, align=4)
        NT = H // TH
        in_specs = [pl.BlockSpec((1, TH, W, C), lambda n, t: (n, t, 0, 0))]
        args = [x]
        kern = partial(_up2x_nearest_kernel, TH=TH, W=W, C=C, scale=float(scale))
    out = pl.pallas_call(
        kern,
        out_shape=jax.ShapeDtypeStruct((N, 2 * H, 2 * W * C), out_dtype),
        grid=(N, NT),
        in_specs=in_specs,
        out_specs=pl.BlockSpec((1, 2 * TH, 2 * W * C), lambda n, t: (n, t, 0)),
        compiler_params=pltpu.CompilerParams(
            dimension_semantics=("parallel", "parallel"),
            vmem_limit_bytes=_VMEM_LIMIT),
    )(*args)
    return out.reshape(N, 2 * H, 2 * W, C)


# ----------------------------- backward warp --------------------------------

def _warp_kernel(img_ref, flow_ref, o_ref, *, H, W, TILE):
    """Border-clamped bilinear backward warp, 4-tap gather formulation.

    img_ref : (1, HW, C) -- resident across the pixel-tile axis (fetched once per image)
    flow_ref: (1, TILE, 2) f32 -- [...,0]=dy, [...,1]=dx in pixels
    o_ref   : (1, TILE, C)

    Replaces the previous dense (TILE, HW) tent-matrix (O(HW^2) VALU work) with jnp.take
    gathers of the 4 taps (review item 1); index math is exact int32, blending is f32.
    """
    t = pl.program_id(1)
    img = img_ref[0]                                                     # (HW, C)
    fl = flow_ref[0].astype(jnp.float32)                                 # (TILE, 2)
    lin = t * TILE + jax.lax.broadcasted_iota(jnp.int32, (TILE, 1), 0)   # output pixel ids
    by = (lin // W).astype(jnp.float32)
    bx = (lin % W).astype(jnp.float32)
    sy = jnp.clip(by + fl[:, 0:1], 0.0, float(H - 1))
    sx = jnp.clip(bx + fl[:, 1:2], 0.0, float(W - 1))
    y0f, x0f = jnp.floor(sy), jnp.floor(sx)
    wy, wx = sy - y0f, sx - x0f
    y0 = y0f.astype(jnp.int32)
    x0 = x0f.astype(jnp.int32)
    y1 = jnp.minimum(y0 + 1, H - 1)
    x1 = jnp.minimum(x0 + 1, W - 1)
    i00 = (y0 * W + x0)[:, 0]
    i01 = (y0 * W + x1)[:, 0]
    i10 = (y1 * W + x0)[:, 0]
    i11 = (y1 * W + x1)[:, 0]
    g00 = jnp.take(img, i00, axis=0).astype(jnp.float32)
    g01 = jnp.take(img, i01, axis=0).astype(jnp.float32)
    g10 = jnp.take(img, i10, axis=0).astype(jnp.float32)
    g11 = jnp.take(img, i11, axis=0).astype(jnp.float32)
    top = g00 + wx * (g01 - g00)
    bot = g10 + wx * (g11 - g10)
    o_ref[0] = (top + wy * (bot - top)).astype(o_ref.dtype)


@jax.jit
def warp(image, flow):
    # image: (N, H, W, C); flow: (N, H, W, 2) in pixel units.
    N, H, W, C = image.shape
    HW = H * W
    # Per-tile temporaries are now only (TILE, C); TILE just needs sublane alignment.
    TILE = _pick_row_tile(HW, per_row_bytes=max(C, 2) * 4 * 16, align=8,
                          budget=2 * 1024 * 1024)
    img = image.reshape(N, HW, C)
    fl = flow.reshape(N, HW, 2).astype(jnp.float32)
    # TODO(synk): at very large resolutions the resident (HW, C) image block should become a
    # flow-bounded row band (PrefetchScalarGridSpec with per-tile source offsets).
    out = pl.pallas_call(
        partial(_warp_kernel, H=H, W=W, TILE=TILE),
        out_shape=jax.ShapeDtypeStruct((N, HW, C), image.dtype),
        grid=(N, HW // TILE),
        in_specs=[
            pl.BlockSpec((1, HW, C), lambda n, t: (n, 0, 0)),   # image resident across tiles
            pl.BlockSpec((1, TILE, 2), lambda n, t: (n, t, 0)),
        ],
        out_specs=pl.BlockSpec((1, TILE, C), lambda n, t: (n, t, 0)),
        compiler_params=pltpu.CompilerParams(
            dimension_semantics=("parallel", "parallel"),
            vmem_limit_bytes=_VMEM_LIMIT),
    )(img, fl)
    return out.reshape(N, H, W, C)


# ------------------------------- util (glue) --------------------------------

def build_image_pyramid(image, levels):
    pyr = []
    for i in range(levels):
        pyr.append(image)
        if i < levels - 1:
            image = avg_pool_2x(image)
    return pyr


def flow_pyramid_synthesis(residual_pyramid):
    flow = residual_pyramid[-1]
    out = [flow]
    for residual in reversed(residual_pyramid[:-1]):
        # fused: residual + 2 * bilinear_upsample(flow)   (one kernel, no extra HBM round trip)
        flow = upsample_2x(flow, mode="bilinear", scale=2.0, residual=residual)
        out.insert(0, flow)
    return out


def multiply_pyramid(pyramid, scalar):
    return [p * scalar for p in pyramid]


def concatenate_pyramids(p1, p2):
    return [jnp.concatenate([a, b], axis=-1) for a, b in zip(p1, p2)]


def pyramid_warp(feature_pyramid, flow_pyramid):
    return [warp(f, fl) for f, fl in zip(feature_pyramid, flow_pyramid)]


# ------------------------------ parameters ----------------------------------

def _conv_init(key, kh, kw, cin, cout):
    w = jax.random.normal(key, (kh, kw, cin, cout), jnp.float32)
    w = w * (1.0 / jnp.sqrt(float(kh * kw * cin)))
    b = jnp.zeros((1, cout), jnp.float32)
    return {"w": w, "b": b}


def _apply_conv(x, p, leaky=True, out_dtype=jnp.float32):
    return conv2d(x, p["w"], p["b"], leaky=leaky, out_dtype=out_dtype)


def init_feature_extractor(key, in_ch, filters, sub_levels):
    keys = jax.random.split(key, 2 * sub_levels)
    params = []
    ch = in_ch
    for i in range(sub_levels):
        cout = filters << i
        params.append((_conv_init(keys[2 * i], 3, 3, ch, cout),
                       _conv_init(keys[2 * i + 1], 3, 3, cout, cout)))
        ch = cout
    return params


def _subtree_apply(params, image, n):
    head = image
    pyr = []
    for i in range(n):
        pa, pb = params[i]
        head = _apply_conv(head, pa, out_dtype=jnp.bfloat16)   # chained conv: bf16 writeback
        head = _apply_conv(head, pb, out_dtype=jnp.bfloat16)   # feature pyramids kept in bf16
        pyr.append(head)
        if i < n - 1:
            head = avg_pool_2x(head)
    return pyr


def feature_extractor_apply(params, image_pyramid, sub_levels):
    sub_pyramids = []
    for i in range(len(image_pyramid)):
        capped = min(len(image_pyramid) - i, sub_levels)
        sub_pyramids.append(_subtree_apply(params, image_pyramid[i], capped))
    feature_pyramid = []
    for i in range(len(image_pyramid)):
        features = sub_pyramids[i][0]
        for j in range(1, sub_levels):
            if j <= i:
                features = jnp.concatenate([features, sub_pyramids[i - j][j]], axis=-1)
        feature_pyramid.append(features)
    return feature_pyramid


def init_flow_estimator(key, in_ch, num_convs, num_filters):
    keys = jax.random.split(key, num_convs + 2)
    convs = []
    ch = in_ch
    for i in range(num_convs):
        convs.append(_conv_init(keys[i], 3, 3, ch, num_filters))
        ch = num_filters
    half = max(num_filters // 2, 1)
    convs.append(_conv_init(keys[num_convs], 1, 1, ch, half))
    convs.append(_conv_init(keys[num_convs + 1], 1, 1, half, 2))
    return convs


def flow_estimator_apply(convs, feats_a, feats_b):
    net = jnp.concatenate([feats_a, feats_b], axis=-1)
    for p in convs[:-1]:
        net = _apply_conv(net, p, leaky=True, out_dtype=jnp.bfloat16)
    return _apply_conv(net, convs[-1], leaky=False, out_dtype=jnp.float32)   # flow head f32


def init_pyramid_flow_estimator(key, filters, flow_convs, flow_filters, sub_levels,
                                pyramid_levels, feat_ch):
    nspec = len(flow_convs)
    keys = jax.random.split(key, nspec + 1)
    spec = [init_flow_estimator(keys[i], 2 * feat_ch(i), flow_convs[i], flow_filters[i])
            for i in range(nspec)]
    shared = init_flow_estimator(keys[-1], 2 * feat_ch(pyramid_levels - 1),
                                 flow_convs[-1], flow_filters[-1])
    return {"spec": spec, "shared": shared, "nspec": nspec}


def pyramid_flow_estimator_apply(params, fp_a, fp_b):
    def predictor(i):
        return params["spec"][i] if i < params["nspec"] else params["shared"]

    levels = len(fp_a)
    v = flow_estimator_apply(predictor(levels - 1), fp_a[-1], fp_b[-1])
    residuals = [v]
    for i in reversed(range(levels - 1)):
        v = upsample_2x(v, mode="bilinear", scale=2.0)
        warped = warp(fp_b[i], v)
        v_res = flow_estimator_apply(predictor(i), fp_a[i], warped)
        residuals.insert(0, v_res)
        v = v_res + v
    return residuals


def init_fusion(key, fusion_levels, specialized_levels, filters, pyramid_channels):
    def nf(i):
        return (filters << i) if i < specialized_levels else (filters << specialized_levels)

    keys = jax.random.split(key, 3 * (fusion_levels - 1) + 1)
    convs = []
    for i in range(fusion_levels - 1):
        in0 = pyramid_channels[fusion_levels - 1] if i == fusion_levels - 2 else nf(i + 1)
        c0 = _conv_init(keys[3 * i + 0], 2, 2, in0, nf(i))
        c1 = _conv_init(keys[3 * i + 1], 3, 3, pyramid_channels[i] + nf(i), nf(i))
        c2 = _conv_init(keys[3 * i + 2], 3, 3, nf(i), nf(i))
        convs.append((c0, c1, c2))
    out_conv = _conv_init(keys[-1], 1, 1, nf(0), 3)
    return {"convs": convs, "out": out_conv}


def fusion_apply(params, pyramid):
    net = pyramid[-1]
    for i in reversed(range(len(pyramid) - 1)):
        c0, c1, c2 = params["convs"][i]
        # TODO(synk): fuse the nearest-2x upsample with the following 2x2 conv into one kernel
        # to avoid writing/re-reading the 4x-larger tensor through HBM.
        net = upsample_2x(net, mode="nearest")
        net = _apply_conv(net, c0, out_dtype=jnp.float32)       # concatenated with f32 pyramid
        net = jnp.concatenate([pyramid[i], net], axis=-1)
        net = _apply_conv(net, c1, out_dtype=jnp.bfloat16)
        net = _apply_conv(net, c2, out_dtype=jnp.bfloat16)
    return _apply_conv(net, params["out"], leaky=False, out_dtype=jnp.float32)


# ------------------------------ Interpolator ---------------------------------

def init_interpolator(key, *, pyramid_levels=4, fusion_pyramid_levels=3,
                      specialized_levels=2, sub_levels=2, filters=8,
                      flow_convs=(2, 2), flow_filters=(8, 16)):
    def feat_ch(i):
        return sum(filters << j for j in range(min(i, sub_levels - 1) + 1))

    k1, k2, k3 = jax.random.split(key, 3)
    extract = init_feature_extractor(k1, 3, filters, sub_levels)
    flow = init_pyramid_flow_estimator(k2, filters, flow_convs, flow_filters,
                                       sub_levels, pyramid_levels, feat_ch)
    aligned_ch = [2 * (3 + feat_ch(i)) + 4 for i in range(fusion_pyramid_levels)]
    fuse = init_fusion(k3, fusion_pyramid_levels, specialized_levels, filters, aligned_ch)
    cfg = dict(pyramid_levels=pyramid_levels,
               fusion_pyramid_levels=fusion_pyramid_levels,
               sub_levels=sub_levels)
    return {"extract": extract, "flow": flow, "fuse": fuse, "cfg": cfg}


def flow_and_fuse(params, image_pyramids, feature_pyramids, time_steps):
    fl = params["cfg"]["fusion_pyramid_levels"]
    fwd_res = pyramid_flow_estimator_apply(params["flow"], feature_pyramids[0], feature_pyramids[1])
    bwd_res = pyramid_flow_estimator_apply(params["flow"], feature_pyramids[1], feature_pyramids[0])
    fwd_flow_pyr = flow_pyramid_synthesis(fwd_res)[:fl]
    bwd_flow_pyr = flow_pyramid_synthesis(bwd_res)[:fl]
    to_warp = [concatenate_pyramids(image_pyramids[0][:fl], feature_pyramids[0][:fl]),
               concatenate_pyramids(image_pyramids[1][:fl], feature_pyramids[1][:fl])]
    results = []
    for t in time_steps:
        backward_flow = multiply_pyramid(bwd_flow_pyr, float(t))
        forward_flow = multiply_pyramid(fwd_flow_pyr, 1.0 - float(t))
        fwd_warped = pyramid_warp(to_warp[0], backward_flow)
        bwd_warped = pyramid_warp(to_warp[1], forward_flow)
        aligned = concatenate_pyramids(fwd_warped, bwd_warped)
        aligned = concatenate_pyramids(aligned, backward_flow)
        aligned = concatenate_pyramids(aligned, forward_flow)
        results.append(fusion_apply(params["fuse"], aligned))
    return results


def recursively_bisect(params, image_pyramids, feature_pyramids,
                       bisections_remaining, final_timesteps):
    if bisections_remaining == 0:
        return flow_and_fuse(params, image_pyramids, feature_pyramids, final_timesteps)
    cfg = params["cfg"]
    mid = flow_and_fuse(params, image_pyramids, feature_pyramids, [0.5])[0]
    left_image_pyramids = [image_pyramids[0], build_image_pyramid(mid, cfg["pyramid_levels"])]
    left_feature_pyramids = [feature_pyramids[0],
                             feature_extractor_apply(params["extract"],
                                                     left_image_pyramids[1], cfg["sub_levels"])]
    left = recursively_bisect(params, left_image_pyramids, left_feature_pyramids,
                              bisections_remaining - 1, final_timesteps)
    right_image_pyramids = [left_image_pyramids[1], image_pyramids[1]]
    right_feature_pyramids = [left_feature_pyramids[1], feature_pyramids[1]]
    right = recursively_bisect(params, right_image_pyramids, right_feature_pyramids,
                               bisections_remaining - 1, final_timesteps)
    return left + [mid] + right


def interpolator_forward(params, x0_nchw, x1_nchw, num_bisections, final_timesteps):
    # layout: public API is NCHW (PyTorch); all Pallas kernels operate on NHWC.
    x0 = jnp.transpose(x0_nchw, (0, 2, 3, 1)).astype(jnp.float32)
    x1 = jnp.transpose(x1_nchw, (0, 2, 3, 1)).astype(jnp.float32)
    L = params["cfg"]["pyramid_levels"]
    image_pyramids = [build_image_pyramid(x0, L), build_image_pyramid(x1, L)]
    feature_pyramids = [feature_extractor_apply(params["extract"], p, params["cfg"]["sub_levels"])
                        for p in image_pyramids]
    outs = recursively_bisect(params, image_pyramids, feature_pyramids,
                              num_bisections, final_timesteps)
    return [jnp.transpose(o, (0, 3, 1, 2)) for o in outs]


if __name__ == "__main__":
    key = jax.random.PRNGKey(0)
    kp, k0, k1 = jax.random.split(key, 3)
    params = init_interpolator(kp)                       # small config, deterministic init
    x0 = jax.random.uniform(k0, (2, 3, 16, 16), jnp.float32)
    x1 = jax.random.uniform(k1, (2, 3, 16, 16), jnp.float32)
    outs = interpolator_forward(params, x0, x1, num_bisections=1, final_timesteps=[0.5])
    outs = [jax.block_until_ready(o) for o in outs]
    assert len(outs) == 3, f"expected 3 interpolated frames, got {len(outs)}"
    assert all(o.shape == (2, 3, 16, 16) for o in outs)
    assert all(bool(jnp.all(jnp.isfinite(o))) for o in outs)
    print("KERNEL_OK")
</pallas_src>

<mosaic_0001>
module attributes {stable_mosaic.version = 11 : i64} {
  func.func @_avgpool2x_kernel(%arg0: i32, %arg1: i32, %arg2: memref<1x16x48xf32, #tpu.memory_space<vmem>>, %arg3: memref<1x8x24xf32, #tpu.memory_space<vmem>>) attributes {dimension_semantics = [#tpu.dimension_semantics<parallel>, #tpu.dimension_semantics<parallel>], iteration_bounds = array<i64: 2, 1>, scalar_prefetch = 0 : i64, scratch_operands = 0 : i64, tpu.core_type = #tpu.core_type<tc>, window_params = [{transform_indices = @transform_0, window_bounds = array<i64: 1, 16, 48>}, {transform_indices = @transform_1, window_bounds = array<i64: 1, 8, 24>}]} {
    %c0 = arith.constant 0 : index
    %c0_0 = arith.constant 0 : index
    %c0_1 = arith.constant 0 : index
    %0 = vector.load %arg2[%c0, %c0_0, %c0_1] : memref<1x16x48xf32, #tpu.memory_space<vmem>>, vector<1x16x48xf32>
    %1 = vector.shape_cast %0 : vector<1x16x48xf32> to vector<16x48xf32>
    %2 = vector.shape_cast %1 : vector<16x48xf32> to vector<8x2x8x6xf32>
    %3 = vector.extract_strided_slice %2 {offsets = [0, 0, 0, 0], sizes = [8, 1, 8, 6], strides = [1, 1, 1, 1]} : vector<8x2x8x6xf32> to vector<8x1x8x6xf32>
    %4 = vector.shape_cast %3 : vector<8x1x8x6xf32> to vector<8x8x6xf32>
    %5 = vector.extract_strided_slice %2 {offsets = [0, 1, 0, 0], sizes = [8, 1, 8, 6], strides = [1, 1, 1, 1]} : vector<8x2x8x6xf32> to vector<8x1x8x6xf32>
    %6 = vector.shape_cast %5 : vector<8x1x8x6xf32> to vector<8x8x6xf32>
    %7 = vector.extract_strided_slice %4 {offsets = [0, 0, 0], sizes = [8, 8, 3], strides = [1, 1, 1]} : vector<8x8x6xf32> to vector<8x8x3xf32>
    %8 = vector.extract_strided_slice %4 {offsets = [0, 0, 3], sizes = [8, 8, 3], strides = [1, 1, 1]} : vector<8x8x6xf32> to vector<8x8x3xf32>
    %9 = arith.addf %7, %8 : vector<8x8x3xf32>
    %10 = vector.extract_strided_slice %6 {offsets = [0, 0, 0], sizes = [8, 8, 3], strides = [1, 1, 1]} : vector<8x8x6xf32> to vector<8x8x3xf32>
    %11 = arith.addf %9, %10 : vector<8x8x3xf32>
    %12 = vector.extract_strided_slice %6 {offsets = [0, 0, 3], sizes = [8, 8, 3], strides = [1, 1, 1]} : vector<8x8x6xf32> to vector<8x8x3xf32>
    %13 = arith.addf %11, %12 : vector<8x8x3xf32>
    %cst = arith.constant 2.500000e-01 : f32
    %14 = vector.broadcast %cst : f32 to vector<8x8x3xf32>
    %15 = arith.mulf %14, %13 : vector<8x8x3xf32>
    %16 = vector.shape_cast %15 : vector<8x8x3xf32> to vector<8x24xf32>
    %c0_2 = arith.constant 0 : index
    %c0_3 = arith.constant 0 : index
    %c0_4 = arith.constant 0 : index
    %17 = vector.load %arg3[%c0_2, %c0_3, %c0_4] : memref<1x8x24xf32, #tpu.memory_space<vmem>>, vector<1x8x24xf32>
    %18 = vector.shape_cast %17 : vector<1x8x24xf32> to vector<8x24xf32>
    %19 = vector.shape_cast %16 : vector<8x24xf32> to vector<1x8x24xf32>
    tpu.vector_store %arg3[%c0_2, %c0_3, %c0_4], %19 {strides = array<i32>} : memref<1x8x24xf32, #tpu.memory_space<vmem>>, vector<1x8x24xf32>,
    return
  }
  func.func @transform_0(%arg0: i32, %arg1: i32) -> (i32, i32, i32) {
    %c0_i32 = arith.constant 0 : i32
    %c0_i32_0 = arith.constant 0 : i32
    return %arg0, %arg1, %c0_i32 : i32, i32, i32
  }
  func.func @transform_1(%arg0: i32, %arg1: i32) -> (i32, i32, i32) {
    %c0_i32 = arith.constant 0 : i32
    %c0_i32_0 = arith.constant 0 : i32
    return %arg0, %arg1, %c0_i32 : i32, i32, i32
  }
}

</mosaic_0001>

<llo_original>
// kernel: avg_pool_2x.1
$region0: #{avg_pool_2x.1}
  #allocation0 [shape = 'u32[]', space=smem, size = 0x4, offset = 0x4, fixed_abs, tag = 'smem constant byte address 0x4 - core index']
  #allocation1 [shape = 'u32[144,128]{1,0:T(1,128)}', space=vmem, size = 0x12000, scoped, tag = 'internal scratch']
  %s0 = inlined_call_operand.vmem [shape: f32[2,16,48], index: 0, kind: input, shape index: {}]
  %s1 = inlined_call_operand.vmem [shape: f32[2,8,24], index: 1, kind: output, shape index: {}]
  %s2 = sld [smem:[#allocation0]]
  $region37: #{avg_pool_2x.1} parent=0
    _
  %s4 = ssub.s32 1, %s2
  %s5 = scalar_select 0, %s4, %s2
  loop: start=0, step=1, limit=4
  $region2: #{avg_pool_2x.1} parent=0 // loop_pre_header
    _
  $region3: #{avg_pool_2x.1} parent=0 // loop_header
    %s7 = sphi 0, %s11
    %p8 = scmp.ge.s32.totalorder %s7, 4
    %s14 = sphi 0, %s26
    %s15 = sphi 0, %s22
    %s16 = sphi 0, %s14
    %s17 = sphi 0, %s15
    %s18 = sphi 0, %s16
    %s19 = sphi 0, %s17
    %s31 = sphi 0, %s33
    %s34 = sphi 0, %s31
    %s35 = sphi 0, %s34
    %s51 = sphi 0, %s35
    %s59 = sphi 0, %s61
    %s62 = sphi 0, %s59
    %s63 = sphi 0, %s62
    %s79 = sphi 0, %s63
  $region4: #{avg_pool_2x.1} parent=0 // loop_header_branch
    %10 = sbr.rel (%p8) target = $region8
  $region5: #{avg_pool_2x.1} parent=0 // loop_body
    %s12 = ssub.s32 %s7, 1
    %s13 = ssub.s32 %s7, 2
    %s20 = sadd.s32 1, %s15
    %p21 = scmp.ge.s32.totalorder %s20, 1
    %s22 = scalar_select %p21, 0, %s20
    %s23 = sadd.s32 1, %s14
    %s24 = scalar_select %p21, %s23, %s14
    %p25 = scmp.ge.s32.totalorder %s24, 2
    %s26 = scalar_select %p25, 0, %s24
    %s27 = ssub.s32 %s14, %s26
    %s28 = ssub.s32 %s15, %s22
    %s29 = sor.u32 %s27, %s28
    %p30 = scmp.eq.s32.totalorder %s29, 0
    %s32 = sadd.s32 %s31, 1
    %s33 = scalar_select %p30, %s31, %s32
    %p36 = pneg %p30
    %p37 = scmp.eq.s32.totalorder %s7, 1
    %p38 = por %p36, %p37
    %p39 = scmp.ne.s32.totalorder %s31, %s34
    %p40 = scmp.eq.s32.totalorder %s7, 0
    %p41 = por %p39, %p40
    %p42 = scmp.ne.s32.totalorder %s31, %s34
    %p43 = scmp.eq.s32.totalorder %s12, 1
    %p44 = por %p42, %p43
    %p45 = scmp.ne.s32.totalorder %s34, %s35
    %p46 = scmp.eq.s32.totalorder %s12, 0
    %p47 = por %p45, %p46
    %p48 = scmp.ne.s32.totalorder %s34, %s35
    %p49 = scmp.eq.s32.totalorder %s13, 1
    %p50 = por %p48, %p49
    %p52 = scmp.ne.s32.totalorder %s35, %s51
    %p53 = scmp.eq.s32.totalorder %s13, 0
    %p54 = por %p52, %p53
    %s55 = ssub.s32 %s14, %s26
    %s56 = ssub.s32 %s15, %s22
    %s57 = sor.u32 %s55, %s56
    %p58 = scmp.eq.s32.totalorder %s57, 0
    %s60 = sadd.s32 %s59, 1
    %s61 = scalar_select %p58, %s59, %s60
    %p64 = pneg %p58
    %p65 = scmp.eq.s32.totalorder %s7, 1
    %p66 = por %p64, %p65
    %p67 = scmp.ne.s32.totalorder %s59, %s62
    %p68 = scmp.eq.s32.totalorder %s7, 0
    %p69 = por %p67, %p68
    %p70 = scmp.ne.s32.totalorder %s59, %s62
    %p71 = scmp.eq.s32.totalorder %s12, 1
    %p72 = por %p70, %p71
    %p73 = scmp.ne.s32.totalorder %s62, %s63
    %p74 = scmp.eq.s32.totalorder %s12, 0
    %p75 = por %p73, %p74
    %p76 = scmp.ne.s32.totalorder %s62, %s63
    %p77 = scmp.eq.s32.totalorder %s13, 1
    %p78 = por %p76, %p77
    %p80 = scmp.ne.s32.totalorder %s63, %s79
    %p81 = scmp.eq.s32.totalorder %s13, 0
    %p82 = por %p80, %p81
    %p83 = scmp.le.s32.totalorder 1, %s7
    %p84 = scmp.lt.s32.totalorder %s7, 3
    %p85 = pnand %p83, %p84
    %p86 = pneg %p85
    // Predicated region
    $region9: #{avg_pool_2x.1} parent=5 // pred_check
      _
    $region10: #{avg_pool_2x.1} parent=5 // pred_check_branch
      %88 = sbr.rel (%p85) target = $region12
    $region11: #{avg_pool_2x.1} parent=5 // pred_region
      %s89 = ssub.s32 %s7, 1
    $region12: #{avg_pool_2x.1} parent=5 // pred_fallthru
      _
    %p90 = scmp.lt.s32.totalorder %s7, 2
    // Predicated region
    $region13: #{avg_pool_2x.1} parent=5 // pred_check
      %p91 = pneg %p90
    $region14: #{avg_pool_2x.1} parent=5 // pred_check_branch
      %93 = sbr.rel (%p91) target = $region16
    $region15: #{avg_pool_2x.1} parent=5 // pred_region
      // Predicated region
      $region17: #{avg_pool_2x.1} parent=15 // pred_check
        %p94 = pneg %p41
      $region18: #{avg_pool_2x.1} parent=15 // pred_check_branch
        %96 = sbr.rel (%p94) target = $region20
      $region19: #{avg_pool_2x.1} parent=15 // pred_region
        %s97 = smul.u32 2, %s15
        %p98 = scmp.lt.s32.totalorder %s14, 1
        %s99 = scalar_select %p98, %s14, 1
        %p100 = scmp.lt.s32.totalorder %s97, 1
        %s101 = scalar_select %p100, %s97, 1
        %s102 = smul.addr %s99, 2
        %s103 = sadd.s32 %s101, %s102
        %s104 = smul.addr %s103, 8
        %s105 = scalar_lea.vmem %s0, %s104
        %s106 = smul.u32 2, %s15
      $region20: #{avg_pool_2x.1} parent=15 // pred_fallthru
        _
    $region16: #{avg_pool_2x.1} parent=5 // pred_fallthru
      _
    %p107 = scmp.le.s32.totalorder 1, %s7
    %p108 = scmp.lt.s32.totalorder %s7, 3
    %p109 = pnand %p107, %p108
    %p110 = pneg %p109
    // Predicated region
    $region21: #{avg_pool_2x.1} parent=5 // pred_check
      _
    $region22: #{avg_pool_2x.1} parent=5 // pred_check_branch
      %112 = sbr.rel (%p109) target = $region24
    $region23: #{avg_pool_2x.1} parent=5 // pred_region
      %s113 = ssub.s32 %s7, 1
      %s114 = smul.u32 2, %s17
      %p115 = scmp.lt.s32.totalorder %s16, 1
      %s116 = scalar_select %p115, %s16, 1
      %p117 = scmp.lt.s32.totalorder %s114, 1
      %s118 = scalar_select %p117, %s114, 1
      %s119 = smul.addr %s116, 2
      %s120 = sadd.s32 %s118, %s119
      %s121 = smul.addr %s120, 8
      %s122 = scalar_lea.vmem %s0, %s121
      %p123 = pneg %p47
      %p124 = pneg %p44
      %p125 = pneg %p75
      %p126 = pneg %p72
      %p127 = scmp.lt.s32.totalorder %s16, 1
      %s128 = scalar_select %p127, %s16, 1
      %p129 = scmp.lt.s32.totalorder %s17, 0
      %s130 = scalar_select %p129, %s17, 0
      %s131 = sadd.s32 %s130, %s128
      %s132 = smul.addr %s131, 8
      %s133 = scalar_lea.vmem %s1, %s132
      %s134 = smul.u32 2, %s17
      %p135 = scmp.lt.s32.totalorder %s16, 1
      %s136 = scalar_select %p135, %s16, 1
      %p137 = scmp.lt.s32.totalorder %s134, 1
      %s138 = scalar_select %p137, %s134, 1
      %s139 = smul.addr %s136, 2
      %s140 = sadd.s32 %s138, %s139
      %s141 = smul.addr %s140, 8
      %s142 = scalar_lea.vmem %s0, %s141
      %s143 = smul.u32 2, %s17
      %p144 = scmp.lt.s32.totalorder %s16, 1
      %s145 = scalar_select %p144, %s16, 1
      %p146 = scmp.lt.s32.totalorder %s17, 0
      %s147 = scalar_select %p146, %s17, 0
      %s148 = sadd.s32 %s147, %s145
      %s149 = smul.addr %s148, 8
      %s150 = scalar_lea.vmem %s1, %s149
      %v151 = vld [vmem:[%s142] sm:$0xff]
      %v152 = vld [vmem:[%s142 + $0x8] sm:$0xff]
      %155 = vrot.lane.b32.xlu0 %v151, 122
      %v156 = vpop.permute.xlu0 %155
      %157 = vrot.lane.b32.xlu0 %v152, 122
      %v158 = vpop.permute.xlu0 %157
      %161 = vrot.lane.b32.xlu0 %v151, 116
      %v162 = vpop.permute.xlu0 %161
      %163 = vrot.lane.b32.xlu0 %v152, 116
      %v164 = vpop.permute.xlu0 %163
      %167 = vrot.lane.b32.xlu0 %v151, 110
      %v168 = vpop.permute.xlu0 %167
      %169 = vrot.lane.b32.xlu0 %v152, 110
      %v170 = vpop.permute.xlu0 %169
      %173 = vrot.lane.b32.xlu0 %v151, 104
      %v174 = vpop.permute.xlu0 %173
      %175 = vrot.lane.b32.xlu0 %v152, 104
      %v176 = vpop.permute.xlu0 %175
      %179 = vrot.lane.b32.xlu0 %v151, 98
      %v180 = vpop.permute.xlu0 %179
      %181 = vrot.lane.b32.xlu0 %v152, 98
      %v182 = vpop.permute.xlu0 %181
      %185 = vrot.lane.b32.xlu0 %v151, 92
      %v186 = vpop.permute.xlu0 %185
      %187 = vrot.lane.b32.xlu0 %v152, 92
      %v188 = vpop.permute.xlu0 %187
      %191 = vrot.lane.b32.xlu0 %v151, 86
      %v192 = vpop.permute.xlu0 %191
      %193 = vrot.lane.b32.xlu0 %v152, 86
      %v194 = vpop.permute.xlu0 %193
      %v197 = vcombine.low %v151, %v162
      %v198 = vcombine.high %v151, %v162
      %v200 = vunpack.c.l.s4 1983009808
      %v201 = vunpack.c.0.s8 %v200
      %v202 = vlaneseq
      %v203 = vshrl.u32 %v202, 7
      %v204 = vsub.s32 %v201, %v203
      %v205 = vrot.slane %v197, %v204
      %v207 = vunpack.c.l.s4 1983009808
      %v208 = vunpack.c.0.s8 %v207
      %v209 = vlaneseq
      %v210 = vshrl.u32 %v209, 7
      %v211 = vsub.s32 %v208, %v210
      %v212 = vrot.slane %v198, %v211
      %v213 = vcombine.low %v156, %v168
      %v214 = vcombine.high %v156, %v168
      %v216 = vunpack.c.l.s4 1983009808
      %v217 = vunpack.c.0.s8 %v216
      %v218 = vlaneseq
      %v219 = vshrl.u32 %v218, 7
      %v220 = vsub.s32 %v217, %v219
      %v221 = vrot.slane %v213, %v220
      %v223 = vunpack.c.l.s4 1983009808
      %v224 = vunpack.c.0.s8 %v223
      %v225 = vlaneseq
      %v226 = vshrl.u32 %v225, 7
      %v227 = vsub.s32 %v224, %v226
      %v228 = vrot.slane %v214, %v227
      %v229 = vcombine.low %v174, %v186
      %v230 = vcombine.high %v174, %v186
      %v232 = vunpack.c.l.s4 1983009808
      %v233 = vunpack.c.0.s8 %v232
      %v234 = vlaneseq
      %v235 = vshrl.u32 %v234, 7
      %v236 = vsub.s32 %v233, %v235
      %v237 = vrot.slane %v229, %v236
      %v239 = vunpack.c.l.s4 1983009808
      %v240 = vunpack.c.0.s8 %v239
      %v241 = vlaneseq
      %v242 = vshrl.u32 %v241, 7
      %v243 = vsub.s32 %v240, %v242
      %v244 = vrot.slane %v230, %v243
      %v245 = vcombine.low %v180, %v192
      %v246 = vcombine.high %v180, %v192
      %v248 = vunpack.c.l.s4 1983009808
      %v249 = vunpack.c.0.s8 %v248
      %v250 = vlaneseq
      %v251 = vshrl.u32 %v250, 7
      %v252 = vsub.s32 %v249, %v251
      %v253 = vrot.slane %v245, %v252
      %v255 = vunpack.c.l.s4 1983009808
      %v256 = vunpack.c.0.s8 %v255
      %v257 = vlaneseq
      %v258 = vshrl.u32 %v257, 7
      %v259 = vsub.s32 %v256, %v258
      %v260 = vrot.slane %v246, %v259
      %v261 = vcombine.low %v205, %v221
      %v262 = vcombine.high %v205, %v221
      %v264 = vunpack.c.l.s4 1934713408
      %v265 = vunpack.c.0.s8 %v264
      %v266 = vlaneseq
      %v267 = vshrl.u32 %v266, 7
      %v268 = vsub.s32 %v265, %v267
      %v269 = vrot.slane %v261, %v268
      %v271 = vunpack.c.l.s4 1934713408
      %v272 = vunpack.c.0.s8 %v271
      %v273 = vlaneseq
      %v274 = vshrl.u32 %v273, 7
      %v275 = vsub.s32 %v272, %v274
      %v276 = vrot.slane %v262, %v275
      %v277 = vcombine.low %v212, %v228
      %v278 = vcombine.high %v212, %v228
      %v280 = vunpack.c.l.s4 1934713408
      %v281 = vunpack.c.0.s8 %v280
      %v282 = vlaneseq
      %v283 = vshrl.u32 %v282, 7
      %v284 = vsub.s32 %v281, %v283
      %v285 = vrot.slane %v277, %v284
      %v287 = vunpack.c.l.s4 1934713408
      %v288 = vunpack.c.0.s8 %v287
      %v289 = vlaneseq
      %v290 = vshrl.u32 %v289, 7
      %v291 = vsub.s32 %v288, %v290
      %v292 = vrot.slane %v278, %v291
      %v293 = vcombine.low %v237, %v253
      %v294 = vcombine.high %v237, %v253
      %v296 = vunpack.c.l.s4 1934713408
      %v297 = vunpack.c.0.s8 %v296
      %v298 = vlaneseq
      %v299 = vshrl.u32 %v298, 7
      %v300 = vsub.s32 %v297, %v299
      %v301 = vrot.slane %v293, %v300
      %v303 = vunpack.c.l.s4 1934713408
      %v304 = vunpack.c.0.s8 %v303
      %v305 = vlaneseq
      %v306 = vshrl.u32 %v305, 7
      %v307 = vsub.s32 %v304, %v306
      %v308 = vrot.slane %v294, %v307
      %v309 = vcombine.low %v244, %v260
      %v310 = vcombine.high %v244, %v260
      %v312 = vunpack.c.l.s4 1934713408
      %v313 = vunpack.c.0.s8 %v312
      %v314 = vlaneseq
      %v315 = vshrl.u32 %v314, 7
      %v316 = vsub.s32 %v313, %v315
      %v317 = vrot.slane %v309, %v316
      %v319 = vunpack.c.l.s4 1934713408
      %v320 = vunpack.c.0.s8 %v319
      %v321 = vlaneseq
      %v322 = vshrl.u32 %v321, 7
      %v323 = vsub.s32 %v320, %v322
      %v324 = vrot.slane %v310, %v323
      %v325 = vcombine.low %v269, %v301
      %v326 = vcombine.high %v269, %v301
      %v327 = vcombine.low %v276, %v308
      %v328 = vcombine.high %v276, %v308
      %v329 = vcombine.low %v285, %v317
      %v330 = vcombine.high %v285, %v317
      %v331 = vcombine.low %v292, %v324
      %v332 = vcombine.high %v292, %v324
      %v333 = vcombine.low %v152, %v164
      %v334 = vcombine.high %v152, %v164
      %v336 = vunpack.c.l.s4 1983009808
      %v337 = vunpack.c.0.s8 %v336
      %v338 = vlaneseq
      %v339 = vshrl.u32 %v338, 7
      %v340 = vsub.s32 %v337, %v339
      %v341 = vrot.slane %v333, %v340
      %v343 = vunpack.c.l.s4 1983009808
      %v344 = vunpack.c.0.s8 %v343
      %v345 = vlaneseq
      %v346 = vshrl.u32 %v345, 7
      %v347 = vsub.s32 %v344, %v346
      %v348 = vrot.slane %v334, %v347
      %v349 = vcombine.low %v158, %v170
      %v350 = vcombine.high %v158, %v170
      %v352 = vunpack.c.l.s4 1983009808
      %v353 = vunpack.c.0.s8 %v352
      %v354 = vlaneseq
      %v355 = vshrl.u32 %v354, 7
      %v356 = vsub.s32 %v353, %v355
      %v357 = vrot.slane %v349, %v356
      %v359 = vunpack.c.l.s4 1983009808
      %v360 = vunpack.c.0.s8 %v359
      %v361 = vlaneseq
      %v362 = vshrl.u32 %v361, 7
      %v363 = vsub.s32 %v360, %v362
      %v364 = vrot.slane %v350, %v363
      %v365 = vcombine.low %v176, %v188
      %v366 = vcombine.high %v176, %v188
      %v368 = vunpack.c.l.s4 1983009808
      %v369 = vunpack.c.0.s8 %v368
      %v370 = vlaneseq
      %v371 = vshrl.u32 %v370, 7
      %v372 = vsub.s32 %v369, %v371
      %v373 = vrot.slane %v365, %v372
      %v375 = vunpack.c.l.s4 1983009808
      %v376 = vunpack.c.0.s8 %v375
      %v377 = vlaneseq
      %v378 = vshrl.u32 %v377, 7
      %v379 = vsub.s32 %v376, %v378
      %v380 = vrot.slane %v366, %v379
      %v381 = vcombine.low %v182, %v194
      %v382 = vcombine.high %v182, %v194
      %v384 = vunpack.c.l.s4 1983009808
      %v385 = vunpack.c.0.s8 %v384
      %v386 = vlaneseq
      %v387 = vshrl.u32 %v386, 7
      %v388 = vsub.s32 %v385, %v387
      %v389 = vrot.slane %v381, %v388
      %v391 = vunpack.c.l.s4 1983009808
      %v392 = vunpack.c.0.s8 %v391
      %v393 = vlaneseq
      %v394 = vshrl.u32 %v393, 7
      %v395 = vsub.s32 %v392, %v394
      %v396 = vrot.slane %v382, %v395
      %v397 = vcombine.low %v341, %v357
      %v398 = vcombine.high %v341, %v357
      %v400 = vunpack.c.l.s4 1934713408
      %v401 = vunpack.c.0.s8 %v400
      %v402 = vlaneseq
      %v403 = vshrl.u32 %v402, 7
      %v404 = vsub.s32 %v401, %v403
      %v405 = vrot.slane %v397, %v404
      %v407 = vunpack.c.l.s4 1934713408
      %v408 = vunpack.c.0.s8 %v407
      %v409 = vlaneseq
      %v410 = vshrl.u32 %v409, 7
      %v411 = vsub.s32 %v408, %v410
      %v412 = vrot.slane %v398, %v411
      %v413 = vcombine.low %v348, %v364
      %v414 = vcombine.high %v348, %v364
      %v416 = vunpack.c.l.s4 1934713408
      %v417 = vunpack.c.0.s8 %v416
      %v418 = vlaneseq
      %v419 = vshrl.u32 %v418, 7
      %v420 = vsub.s32 %v417, %v419
      %v421 = vrot.slane %v413, %v420
      %v423 = vunpack.c.l.s4 1934713408
      %v424 = vunpack.c.0.s8 %v423
      %v425 = vlaneseq
      %v426 = vshrl.u32 %v425, 7
      %v427 = vsub.s32 %v424, %v426
      %v428 = vrot.slane %v414, %v427
      %v429 = vcombine.low %v373, %v389
      %v430 = vcombine.high %v373, %v389
      %v432 = vunpack.c.l.s4 1934713408
      %v433 = vunpack.c.0.s8 %v432
      %v434 = vlaneseq
      %v435 = vshrl.u32 %v434, 7
      %v436 = vsub.s32 %v433, %v435
      %v437 = vrot.slane %v429, %v436
      %v439 = vunpack.c.l.s4 1934713408
      %v440 = vunpack.c.0.s8 %v439
      %v441 = vlaneseq
      %v442 = vshrl.u32 %v441, 7
      %v443 = vsub.s32 %v440, %v442
      %v444 = vrot.slane %v430, %v443
      %v445 = vcombine.low %v380, %v396
      %v446 = vcombine.high %v380, %v396
      %v448 = vunpack.c.l.s4 1934713408
      %v449 = vunpack.c.0.s8 %v448
      %v450 = vlaneseq
      %v451 = vshrl.u32 %v450, 7
      %v452 = vsub.s32 %v449, %v451
      %v453 = vrot.slane %v445, %v452
      %v455 = vunpack.c.l.s4 1934713408
      %v456 = vunpack.c.0.s8 %v455
      %v457 = vlaneseq
      %v458 = vshrl.u32 %v457, 7
      %v459 = vsub.s32 %v456, %v458
      %v460 = vrot.slane %v446, %v459
      %v461 = vcombine.low %v405, %v437
      %v462 = vcombine.high %v405, %v437
      %v463 = vcombine.low %v412, %v444
      %v464 = vcombine.high %v412, %v444
      %v465 = vcombine.low %v421, %v453
      %v466 = vcombine.high %v421, %v453
      %v467 = vcombine.low %v428, %v460
      %v468 = vcombine.high %v428, %v460
      %477 = vrot.lane.b32.xlu0 %v325, 125
      %v478 = vpop.permute.xlu0 %477
      %479 = vrot.lane.b32.xlu0 %v327, 125
      %v480 = vpop.permute.xlu0 %479
      %481 = vrot.lane.b32.xlu0 %v329, 125
      %v482 = vpop.permute.xlu0 %481
      %483 = vrot.lane.b32.xlu0 %v331, 125
      %v484 = vpop.permute.xlu0 %483
      %485 = vrot.lane.b32.xlu0 %v461, 125
      %v486 = vpop.permute.xlu0 %485
      %487 = vrot.lane.b32.xlu0 %v463, 125
      %v488 = vpop.permute.xlu0 %487
      %489 = vrot.lane.b32.xlu0 %v465, 125
      %v490 = vpop.permute.xlu0 %489
      %491 = vrot.lane.b32.xlu0 %v467, 125
      %v492 = vpop.permute.xlu0 %491
      %v501 = vadd.f32 %v325, %v478
      %v502 = vadd.f32 %v327, %v480
      %v503 = vadd.f32 %v329, %v482
      %v504 = vadd.f32 %v331, %v484
      %v505 = vadd.f32 %v461, %v486
      %v506 = vadd.f32 %v463, %v488
      %v507 = vadd.f32 %v465, %v490
      %v508 = vadd.f32 %v467, %v492
      %v509 = vadd.f32 %v501, %v326
      %v510 = vadd.f32 %v502, %v328
      %v511 = vadd.f32 %v503, %v330
      %v512 = vadd.f32 %v504, %v332
      %v513 = vadd.f32 %v505, %v462
      %v514 = vadd.f32 %v506, %v464
      %v515 = vadd.f32 %v507, %v466
      %v516 = vadd.f32 %v508, %v468
      %525 = vrot.lane.b32.xlu0 %v326, 125
      %v526 = vpop.permute.xlu0 %525
      %527 = vrot.lane.b32.xlu0 %v328, 125
      %v528 = vpop.permute.xlu0 %527
      %529 = vrot.lane.b32.xlu0 %v330, 125
      %v530 = vpop.permute.xlu0 %529
      %531 = vrot.lane.b32.xlu0 %v332, 125
      %v532 = vpop.permute.xlu0 %531
      %533 = vrot.lane.b32.xlu0 %v462, 125
      %v534 = vpop.permute.xlu0 %533
      %535 = vrot.lane.b32.xlu0 %v464, 125
      %v536 = vpop.permute.xlu0 %535
      %537 = vrot.lane.b32.xlu0 %v466, 125
      %v538 = vpop.permute.xlu0 %537
      %539 = vrot.lane.b32.xlu0 %v468, 125
      %v540 = vpop.permute.xlu0 %539
      %v549 = vadd.f32 %v509, %v526
      %v550 = vadd.f32 %v510, %v528
      %v551 = vadd.f32 %v511, %v530
      %v552 = vadd.f32 %v512, %v532
      %v553 = vadd.f32 %v513, %v534
      %v554 = vadd.f32 %v514, %v536
      %v555 = vadd.f32 %v515, %v538
      %v556 = vadd.f32 %v516, %v540
      %v557 = vmul.f32 %v549, 0.25
      %v558 = vmul.f32 %v550, 0.25
      %v559 = vmul.f32 %v551, 0.25
      %v560 = vmul.f32 %v552, 0.25
      %v561 = vmul.f32 %v553, 0.25
      %v562 = vmul.f32 %v554, 0.25
      %v563 = vmul.f32 %v555, 0.25
      %v564 = vmul.f32 %v556, 0.25
      %v565 = vcombine.low %v557, %v559
      %v566 = vcombine.high %v557, %v559
      %v568 = vunpack.c.l.s4 1983009808
      %v569 = vunpack.c.0.s8 %v568
      %v570 = vlaneseq
      %v571 = vshrl.u32 %v570, 7
      %v572 = vsub.s32 %v569, %v571
      %v573 = vrot.slane %v565, %v572
      %v575 = vunpack.c.l.s4 1983009808
      %v576 = vunpack.c.0.s8 %v575
      %v577 = vlaneseq
      %v578 = vshrl.u32 %v577, 7
      %v579 = vsub.s32 %v576, %v578
      %v580 = vrot.slane %v566, %v579
      %v581 = vcombine.low %v558, %v560
      %v582 = vcombine.high %v558, %v560
      %v584 = vunpack.c.l.s4 1983009808
      %v585 = vunpack.c.0.s8 %v584
      %v586 = vlaneseq
      %v587 = vshrl.u32 %v586, 7
      %v588 = vsub.s32 %v585, %v587
      %v589 = vrot.slane %v581, %v588
      %v591 = vunpack.c.l.s4 1983009808
      %v592 = vunpack.c.0.s8 %v591
      %v593 = vlaneseq
      %v594 = vshrl.u32 %v593, 7
      %v595 = vsub.s32 %v592, %v594
      %v596 = vrot.slane %v582, %v595
      %v597 = vcombine.low %v561, %v563
      %v598 = vcombine.high %v561, %v563
      %v600 = vunpack.c.l.s4 1983009808
      %v601 = vunpack.c.0.s8 %v600
      %v602 = vlaneseq
      %v603 = vshrl.u32 %v602, 7
      %v604 = vsub.s32 %v601, %v603
      %v605 = vrot.slane %v597, %v604
      %v607 = vunpack.c.l.s4 1983009808
      %v608 = vunpack.c.0.s8 %v607
      %v609 = vlaneseq
      %v610 = vshrl.u32 %v609, 7
      %v611 = vsub.s32 %v608, %v610
      %v612 = vrot.slane %v598, %v611
      %v613 = vcombine.low %v562, %v564
      %v614 = vcombine.high %v562, %v564
      %v616 = vunpack.c.l.s4 1983009808
      %v617 = vunpack.c.0.s8 %v616
      %v618 = vlaneseq
      %v619 = vshrl.u32 %v618, 7
      %v620 = vsub.s32 %v617, %v619
      %v621 = vrot.slane %v613, %v620
      %v623 = vunpack.c.l.s4 1983009808
      %v624 = vunpack.c.0.s8 %v623
      %v625 = vlaneseq
      %v626 = vshrl.u32 %v625, 7
      %v627 = vsub.s32 %v624, %v626
      %v628 = vrot.slane %v614, %v627
      %v629 = vcombine.low %v573, %v589
      %v630 = vcombine.high %v573, %v589
      %v632 = vunpack.c.l.s4 1934713408
      %v633 = vunpack.c.0.s8 %v632
      %v634 = vlaneseq
      %v635 = vshrl.u32 %v634, 7
      %v636 = vsub.s32 %v633, %v635
      %v637 = vrot.slane %v629, %v636
      %v639 = vunpack.c.l.s4 1934713408
      %v640 = vunpack.c.0.s8 %v639
      %v641 = vlaneseq
      %v642 = vshrl.u32 %v641, 7
      %v643 = vsub.s32 %v640, %v642
      %v644 = vrot.slane %v630, %v643
      %v645 = vcombine.low %v580, %v596
      %v646 = vcombine.high %v580, %v596
      %v648 = vunpack.c.l.s4 1934713408
      %v649 = vunpack.c.0.s8 %v648
      %v650 = vlaneseq
      %v651 = vshrl.u32 %v650, 7
      %v652 = vsub.s32 %v649, %v651
      %v653 = vrot.slane %v645, %v652
      %v655 = vunpack.c.l.s4 1934713408
      %v656 = vunpack.c.0.s8 %v655
      %v657 = vlaneseq
      %v658 = vshrl.u32 %v657, 7
      %v659 = vsub.s32 %v656, %v658
      %v660 = vrot.slane %v646, %v659
      %v661 = vcombine.low %v605, %v621
      %v662 = vcombine.high %v605, %v621
      %v664 = vunpack.c.l.s4 1934713408
      %v665 = vunpack.c.0.s8 %v664
      %v666 = vlaneseq
      %v667 = vshrl.u32 %v666, 7
      %v668 = vsub.s32 %v665, %v667
      %v669 = vrot.slane %v661, %v668
      %v671 = vunpack.c.l.s4 1934713408
      %v672 = vunpack.c.0.s8 %v671
      %v673 = vlaneseq
      %v674 = vshrl.u32 %v673, 7
      %v675 = vsub.s32 %v672, %v674
      %v676 = vrot.slane %v662, %v675
      %v677 = vcombine.low %v612, %v628
      %v678 = vcombine.high %v612, %v628
      %v680 = vunpack.c.l.s4 1934713408
      %v681 = vunpack.c.0.s8 %v680
      %v682 = vlaneseq
      %v683 = vshrl.u32 %v682, 7
      %v684 = vsub.s32 %v681, %v683
      %v685 = vrot.slane %v677, %v684
      %v687 = vunpack.c.l.s4 1934713408
      %v688 = vunpack.c.0.s8 %v687
      %v689 = vlaneseq
      %v690 = vshrl.u32 %v689, 7
      %v691 = vsub.s32 %v688, %v690
      %v692 = vrot.slane %v678, %v691
      %v693 = vcombine.low %v637, %v669
      %v694 = vcombine.high %v637, %v669
      %v695 = vcombine.low %v644, %v676
      %v696 = vcombine.high %v644, %v676
      %v697 = vcombine.low %v653, %v685
      %v698 = vcombine.high %v653, %v685
      %v699 = vcombine.low %v660, %v692
      %v700 = vcombine.high %v660, %v692
      %702 = vrot.lane.b32.xlu0 %v694, 3
      %v703 = vpop.permute.xlu0 %702
      %706 = vrot.lane.b32.xlu0 %v695, 6
      %v707 = vpop.permute.xlu0 %706
      %710 = vrot.lane.b32.xlu0 %v696, 9
      %v711 = vpop.permute.xlu0 %710
      %714 = vrot.lane.b32.xlu0 %v697, 12
      %v715 = vpop.permute.xlu0 %714
      %718 = vrot.lane.b32.xlu0 %v698, 15
      %v719 = vpop.permute.xlu0 %718
      %722 = vrot.lane.b32.xlu0 %v699, 18
      %v723 = vpop.permute.xlu0 %722
      %726 = vrot.lane.b32.xlu0 %v700, 21
      %v727 = vpop.permute.xlu0 %726
      %vm729 = vcmask 23552
      %v730 = vsel %vm729, %v693, %v703
      %vm731 = vcmask 48128
      %v732 = vsel %vm731, %v730, %v707
      %vm733 = vcmask 72704
      %v734 = vsel %vm733, %v732, %v711
      %vm735 = vcmask 97280
      %v736 = vsel %vm735, %v734, %v715
      %vm737 = vcmask 121856
      %v738 = vsel %vm737, %v736, %v719
      %vm739 = vcmask 146432
      %v740 = vsel %vm739, %v738, %v723
      %vm741 = vcmask 171008
      %v742 = vsel %vm741, %v740, %v727
      %vm743 = vcmask 195584
      %744 = vst.msk [vmem:[%s150] sm:$0xff] %vm743, %v742
      %p745 = scmp.lt.s32.totalorder %s16, 1
      %s746 = scalar_select %p745, %s16, 1
      %p747 = scmp.lt.s32.totalorder %s17, 0
      %s748 = scalar_select %p747, %s17, 0
      %s749 = sadd.s32 %s748, %s746
      %s750 = smul.addr %s749, 8
      %s751 = scalar_lea.vmem %s1, %s750
      // Predicated region
      $region25: #{avg_pool_2x.1} parent=23 // pred_check
        %p752 = pneg %p72
      $region26: #{avg_pool_2x.1} parent=23 // pred_check_branch
        %754 = sbr.rel (%p752) target = $region28
      $region27: #{avg_pool_2x.1} parent=23 // pred_region
        _
      $region28: #{avg_pool_2x.1} parent=23 // pred_fallthru
        _
    $region24: #{avg_pool_2x.1} parent=5 // pred_fallthru
      _
    %p755 = scmp.le.s32.totalorder 2, %s7
    // Predicated region
    $region29: #{avg_pool_2x.1} parent=5 // pred_check
      %p756 = pneg %p755
    $region30: #{avg_pool_2x.1} parent=5 // pred_check_branch
      %758 = sbr.rel (%p756) target = $region32
    $region31: #{avg_pool_2x.1} parent=5 // pred_region
      %s759 = ssub.s32 %s7, 2
      // Predicated region
      $region33: #{avg_pool_2x.1} parent=31 // pred_check
        %p760 = pneg %p78
      $region34: #{avg_pool_2x.1} parent=31 // pred_check_branch
        %762 = sbr.rel (%p760) target = $region36
      $region35: #{avg_pool_2x.1} parent=31 // pred_region
        %p763 = scmp.lt.s32.totalorder %s18, 1
        %s764 = scalar_select %p763, %s18, 1
        %p765 = scmp.lt.s32.totalorder %s19, 0
        %s766 = scalar_select %p765, %s19, 0
        %s767 = sadd.s32 %s766, %s764
        %s768 = smul.addr %s767, 8
        %s769 = scalar_lea.vmem %s1, %s768
      $region36: #{avg_pool_2x.1} parent=31 // pred_fallthru
        _
    $region32: #{avg_pool_2x.1} parent=5 // pred_fallthru
      _
  $region6: #{avg_pool_2x.1} parent=0 // loop_footer
    %s11 = sadd.s32 1, %s7
  $region7: #{avg_pool_2x.1} parent=0 // loop_footer_branch
    %6 = sbr.rel target = $region3
  $region8: #{avg_pool_2x.1} parent=0 // loop_exit
    _

</llo_original>
